<compile_context>
chip_gen: v7x
topology: tpu7x:2x2x1
jax: 0.10.0
libtpu: 0.0.40
codegen_flags: <defaults>
</compile_context>

<pallas_src>
import functools

import jax
import jax.numpy as jnp
from jax.experimental import pallas as pl
from jax.experimental.pallas import tpu as pltpu

LANE = 128


def _round_up(n, m):
    return ((n + m - 1) // m) * m


def _three_layer_kernel(x_ref, w1_ref, b1_ref, w2_ref, b2_ref, w3_ref, b3_ref,
                        o_ref):
    # --- fc1 + ReLU (dropout1 == identity in eval) ---
    h1 = jnp.dot(x_ref[...], w1_ref[...], preferred_element_type=jnp.float32)
    h1 = jnp.maximum(h1 + b1_ref[...], 0.0)

    # --- fc2 + ReLU (dropout2 == identity in eval) ---
    h2 = jnp.dot(h1.astype(jnp.bfloat16), w2_ref[...],
                 preferred_element_type=jnp.float32)
    h2 = jnp.maximum(h2 + b2_ref[...], 0.0)

    # --- fc3 (padded logit columns carry a -1e30 bias -> vanish in softmax) ---
    logits = jnp.dot(h2.astype(jnp.bfloat16), w3_ref[...],
                     preferred_element_type=jnp.float32)
    logits = logits + b3_ref[...]

    # --- numerically stable softmax along last dim ---
    m = jnp.max(logits, axis=-1, keepdims=True)
    e = jnp.exp(logits - m)
    denom = jnp.sum(e, axis=-1, keepdims=True)
    o_ref[...] = (e * pl.reciprocal(denom, approx=True)).astype(o_ref.dtype)


@functools.partial(jax.jit, static_argnames=("block_batch",))
def three_layer_nn(x, w1, b1, w2, b2, w3, b3, *, block_batch=256):
    """x: [B, input_size] f32; weights: [in, out]; biases: [1, out]. Returns [B, out]."""
    B, in_size = x.shape
    h1_size, h2_size = w1.shape[1], w2.shape[1]
    out_size = w3.shape[1]

    # Lane-pad every feature dim to a multiple of 128.
    in_p = _round_up(in_size, LANE)
    h1_p = _round_up(h1_size, LANE)
    h2_p = _round_up(h2_size, LANE)
    out_p = _round_up(out_size, LANE)

    # Batch tile: large enough to amortize per-step overhead, capped so
    # f32 intermediates stay well within vreg/VMEM budgets on all generations.
    TB = min(block_batch, _round_up(B, 8))
    Bp = _round_up(B, TB)

    f32, bf16 = jnp.float32, jnp.bfloat16
    xp = jnp.zeros((Bp, in_p), bf16).at[:B, :in_size].set(x.astype(bf16))
    w1p = jnp.zeros((in_p, h1_p), bf16).at[:in_size, :h1_size].set(w1.astype(bf16))
    b1p = jnp.zeros((1, h1_p), f32).at[:, :h1_size].set(b1)
    w2p = jnp.zeros((h1_p, h2_p), bf16).at[:h1_size, :h2_size].set(w2.astype(bf16))
    b2p = jnp.zeros((1, h2_p), f32).at[:, :h2_size].set(b2)
    w3p = jnp.zeros((h2_p, out_p), bf16).at[:h2_size, :out_size].set(w3.astype(bf16))
    # Padded logit columns get a huge negative bias -> exp() underflows to 0.
    b3p = jnp.full((1, out_p), -1e30, f32).at[:, :out_size].set(b3)

    grid = (pl.cdiv(Bp, TB),)

    flops = 2 * Bp * (in_p * h1_p + h1_p * h2_p + h2_p * out_p)
    bytes_accessed = (xp.size * 2 + w1p.size * 2 + w2p.size * 2 + w3p.size * 2
                      + b1p.size * 4 + b2p.size * 4 + b3p.size * 4
                      + Bp * out_p * 4)

    out_padded = pl.pallas_call(
        _three_layer_kernel,
        out_shape=jax.ShapeDtypeStruct((Bp, out_p), f32),
        grid=grid,
        in_specs=[
            pl.BlockSpec((TB, in_p), lambda i: (i, 0)),      # x tile (pipelined)
            pl.BlockSpec((in_p, h1_p), lambda i: (0, 0)),    # weights: VMEM-resident
            pl.BlockSpec((1, h1_p), lambda i: (0, 0)),
            pl.BlockSpec((h1_p, h2_p), lambda i: (0, 0)),
            pl.BlockSpec((1, h2_p), lambda i: (0, 0)),
            pl.BlockSpec((h2_p, out_p), lambda i: (0, 0)),
            pl.BlockSpec((1, out_p), lambda i: (0, 0)),
        ],
        out_specs=pl.BlockSpec((TB, out_p), lambda i: (i, 0)),
        compiler_params=pltpu.CompilerParams(
            dimension_semantics=("parallel",),
        ),
        cost_estimate=pl.CostEstimate(
            flops=int(flops),
            transcendentals=int(Bp * out_p),
            bytes_accessed=int(bytes_accessed),
        ),
    )(xp, w1p, b1p, w2p, b2p, w3p, b3p)

    return out_padded[:B, :out_size]


def init_params(key, input_size, hidden1, hidden2, output_size):
    """Deterministic init mirroring nn.Linear default (U(-1/sqrt(fan_in), +))."""
    ks = jax.random.split(key, 6)

    def linear(kw, kb, fan_in, fan_out):
        bound = 1.0 / jnp.sqrt(fan_in)
        w = jax.random.uniform(kw, (fan_in, fan_out), jnp.float32, -bound, bound)
        b = jax.random.uniform(kb, (1, fan_out), jnp.float32, -bound, bound)
        return w, b

    w1, b1 = linear(ks[0], ks[1], input_size, hidden1)
    w2, b2 = linear(ks[2], ks[3], hidden1, hidden2)
    w3, b3 = linear(ks[4], ks[5], hidden2, output_size)
    return w1, b1, w2, b2, w3, b3


def _reference(x, w1, b1, w2, b2, w3, b3):
    h1 = jnp.maximum(x @ w1 + b1, 0.0)
    h2 = jnp.maximum(h1 @ w2 + b2, 0.0)
    logits = h2 @ w3 + b3
    return jax.nn.softmax(logits, axis=-1)


if __name__ == "__main__":
    input_size, hidden1, hidden2, output_size = 32, 64, 64, 16
    dropout_prob = 0.1  # unused in eval-mode forward
    batch = 8

    key = jax.random.PRNGKey(0)
    kx, kp = jax.random.split(key)
    x = jax.random.normal(kx, (batch, input_size), jnp.float32)
    params = init_params(kp, input_size, hidden1, hidden2, output_size)

    out = three_layer_nn(x, *params)
    out = jax.block_until_ready(out)

    ref = _reference(x, *params)
    assert out.shape == (batch, output_size)
    # bf16 matmul operands + approx reciprocal -> loosen tolerances vs f32 reference.
    assert jnp.allclose(out, ref, atol=2e-2, rtol=2e-2), "mismatch vs reference"
    assert jnp.allclose(jnp.sum(out, axis=-1), 1.0, atol=1e-2), "softmax rows must sum to ~1"

    print("KERNEL_OK")
</pallas_src>

<mosaic_0001>
module attributes {stable_mosaic.version = 11 : i64} {
  func.func @_three_layer_kernel(%arg0: i32, %arg1: memref<8x128xbf16, #tpu.memory_space<vmem>>, %arg2: memref<128x128xbf16, #tpu.memory_space<vmem>>, %arg3: memref<1x128xf32, #tpu.memory_space<vmem>>, %arg4: memref<128x128xbf16, #tpu.memory_space<vmem>>, %arg5: memref<1x128xf32, #tpu.memory_space<vmem>>, %arg6: memref<128x128xbf16, #tpu.memory_space<vmem>>, %arg7: memref<1x128xf32, #tpu.memory_space<vmem>>, %arg8: memref<8x128xf32, #tpu.memory_space<vmem>>) attributes {dimension_semantics = [#tpu.dimension_semantics<parallel>], iteration_bounds = array<i64: 1>, scalar_prefetch = 0 : i64, scratch_operands = 0 : i64, tpu.core_type = #tpu.core_type<tc>, window_params = [{transform_indices = @transform_0, window_bounds = array<i64: 8, 128>}, {pipeline_mode = #tpu.pipeline_mode<synchronous>, transform_indices = @transform_1, window_bounds = array<i64: 128, 128>}, {pipeline_mode = #tpu.pipeline_mode<synchronous>, transform_indices = @transform_2, window_bounds = array<i64: 1, 128>}, {pipeline_mode = #tpu.pipeline_mode<synchronous>, transform_indices = @transform_3, window_bounds = array<i64: 128, 128>}, {pipeline_mode = #tpu.pipeline_mode<synchronous>, transform_indices = @transform_4, window_bounds = array<i64: 1, 128>}, {pipeline_mode = #tpu.pipeline_mode<synchronous>, transform_indices = @transform_5, window_bounds = array<i64: 128, 128>}, {pipeline_mode = #tpu.pipeline_mode<synchronous>, transform_indices = @transform_6, window_bounds = array<i64: 1, 128>}, {transform_indices = @transform_7, window_bounds = array<i64: 8, 128>}]} {
    %c0 = arith.constant 0 : index
    %c0_0 = arith.constant 0 : index
    %0 = vector.load %arg1[%c0, %c0_0] : memref<8x128xbf16, #tpu.memory_space<vmem>>, vector<8x128xbf16>
    %c0_1 = arith.constant 0 : index
    %c0_2 = arith.constant 0 : index
    %1 = vector.load %arg2[%c0_1, %c0_2] : memref<128x128xbf16, #tpu.memory_space<vmem>>, vector<128x128xbf16>
    %cst = arith.constant dense<0.000000e+00> : vector<8x128xf32>
    %2 = tpu.matmul %0, %1, %cst {dimension_numbers = #tpu.dot_dimension_numbers<[1], [0], [0], [1], [0, 0, 1, 1], [], []>} : vector<8x128xbf16>, vector<128x128xbf16>, vector<8x128xf32> -> vector<8x128xf32>
    %c0_3 = arith.constant 0 : index
    %c0_4 = arith.constant 0 : index
    %3 = vector.load %arg3[%c0_3, %c0_4] : memref<1x128xf32, #tpu.memory_space<vmem>>, vector<1x128xf32>
    %4 = vector.broadcast %3 : vector<1x128xf32> to vector<8x128xf32>
    %5 = arith.addf %2, %4 : vector<8x128xf32>
    %cst_5 = arith.constant 0.000000e+00 : f32
    %6 = vector.broadcast %cst_5 : f32 to vector<8x128xf32>
    %7 = arith.maximumf %5, %6 : vector<8x128xf32>
    %8 = arith.truncf %7 : vector<8x128xf32> to vector<8x128xbf16>
    %c0_6 = arith.constant 0 : index
    %c0_7 = arith.constant 0 : index
    %9 = vector.load %arg4[%c0_6, %c0_7] : memref<128x128xbf16, #tpu.memory_space<vmem>>, vector<128x128xbf16>
    %cst_8 = arith.constant dense<0.000000e+00> : vector<8x128xf32>
    %10 = tpu.matmul %8, %9, %cst_8 {dimension_numbers = #tpu.dot_dimension_numbers<[1], [0], [0], [1], [0, 0, 1, 1], [], []>} : vector<8x128xbf16>, vector<128x128xbf16>, vector<8x128xf32> -> vector<8x128xf32>
    %c0_9 = arith.constant 0 : index
    %c0_10 = arith.constant 0 : index
    %11 = vector.load %arg5[%c0_9, %c0_10] : memref<1x128xf32, #tpu.memory_space<vmem>>, vector<1x128xf32>
    %12 = vector.broadcast %11 : vector<1x128xf32> to vector<8x128xf32>
    %13 = arith.addf %10, %12 : vector<8x128xf32>
    %cst_11 = arith.constant 0.000000e+00 : f32
    %14 = vector.broadcast %cst_11 : f32 to vector<8x128xf32>
    %15 = arith.maximumf %13, %14 : vector<8x128xf32>
    %16 = arith.truncf %15 : vector<8x128xf32> to vector<8x128xbf16>
    %c0_12 = arith.constant 0 : index
    %c0_13 = arith.constant 0 : index
    %17 = vector.load %arg6[%c0_12, %c0_13] : memref<128x128xbf16, #tpu.memory_space<vmem>>, vector<128x128xbf16>
    %cst_14 = arith.constant dense<0.000000e+00> : vector<8x128xf32>
    %18 = tpu.matmul %16, %17, %cst_14 {dimension_numbers = #tpu.dot_dimension_numbers<[1], [0], [0], [1], [0, 0, 1, 1], [], []>} : vector<8x128xbf16>, vector<128x128xbf16>, vector<8x128xf32> -> vector<8x128xf32>
    %c0_15 = arith.constant 0 : index
    %c0_16 = arith.constant 0 : index
    %19 = vector.load %arg7[%c0_15, %c0_16] : memref<1x128xf32, #tpu.memory_space<vmem>>, vector<1x128xf32>
    %20 = vector.broadcast %19 : vector<1x128xf32> to vector<8x128xf32>
    %21 = arith.addf %18, %20 : vector<8x128xf32>
    %cst_17 = arith.constant dense<0xFF800000> : vector<8xf32>
    %22 = vector.multi_reduction <maximumf>, %21, %cst_17 [1] : vector<8x128xf32> to vector<8xf32>
    %23 = vector.shape_cast %22 : vector<8xf32> to vector<8x1xf32>
    %24 = vector.broadcast %23 : vector<8x1xf32> to vector<8x128xf32>
    %25 = arith.subf %21, %24 : vector<8x128xf32>
    %26 = math.exp %25 : vector<8x128xf32>
    %cst_18 = arith.constant dense<0.000000e+00> : vector<8xf32>
    %27 = vector.multi_reduction <add>, %26, %cst_18 [1] : vector<8x128xf32> to vector<8xf32>
    %28 = vector.shape_cast %27 : vector<8xf32> to vector<8x1xf32>
    %29 = tpu.reciprocal %28 {approx = true} : vector<8x1xf32> -> vector<8x1xf32>
    %30 = vector.broadcast %29 : vector<8x1xf32> to vector<8x128xf32>
    %31 = arith.mulf %26, %30 : vector<8x128xf32>
    %c0_19 = arith.constant 0 : index
    %c0_20 = arith.constant 0 : index
    %32 = vector.load %arg8[%c0_19, %c0_20] : memref<8x128xf32, #tpu.memory_space<vmem>>, vector<8x128xf32>
    tpu.vector_store %arg8[%c0_19, %c0_20], %31 {strides = array<i32>} : memref<8x128xf32, #tpu.memory_space<vmem>>, vector<8x128xf32>,
    return
  }
  func.func @transform_0(%arg0: i32) -> (i32, i32) {
    %c0_i32 = arith.constant 0 : i32
    %c0_i32_0 = arith.constant 0 : i32
    return %arg0, %c0_i32 : i32, i32
  }
  func.func @transform_1(%arg0: i32) -> (i32, i32) {
    %c0_i32 = arith.constant 0 : i32
    %c0_i32_0 = arith.constant 0 : i32
    %c0_i32_1 = arith.constant 0 : i32
    return %c0_i32, %c0_i32_0 : i32, i32
  }
  func.func @transform_2(%arg0: i32) -> (i32, i32) {
    %c0_i32 = arith.constant 0 : i32
    %c0_i32_0 = arith.constant 0 : i32
    %c0_i32_1 = arith.constant 0 : i32
    return %c0_i32, %c0_i32_0 : i32, i32
  }
  func.func @transform_3(%arg0: i32) -> (i32, i32) {
    %c0_i32 = arith.constant 0 : i32
    %c0_i32_0 = arith.constant 0 : i32
    %c0_i32_1 = arith.constant 0 : i32
    return %c0_i32, %c0_i32_0 : i32, i32
  }
  func.func @transform_4(%arg0: i32) -> (i32, i32) {
    %c0_i32 = arith.constant 0 : i32
    %c0_i32_0 = arith.constant 0 : i32
    %c0_i32_1 = arith.constant 0 : i32
    return %c0_i32, %c0_i32_0 : i32, i32
  }
  func.func @transform_5(%arg0: i32) -> (i32, i32) {
    %c0_i32 = arith.constant 0 : i32
    %c0_i32_0 = arith.constant 0 : i32
    %c0_i32_1 = arith.constant 0 : i32
    return %c0_i32, %c0_i32_0 : i32, i32
  }
  func.func @transform_6(%arg0: i32) -> (i32, i32) {
    %c0_i32 = arith.constant 0 : i32
    %c0_i32_0 = arith.constant 0 : i32
    %c0_i32_1 = arith.constant 0 : i32
    return %c0_i32, %c0_i32_0 : i32, i32
  }
  func.func @transform_7(%arg0: i32) -> (i32, i32) {
    %c0_i32 = arith.constant 0 : i32
    %c0_i32_0 = arith.constant 0 : i32
    return %arg0, %c0_i32 : i32, i32
  }
}

</mosaic_0001>

<llo_original>
// kernel: three_layer_nn.1
$region0: #{three_layer_nn.1}
  #allocation0 [shape = 'u32[]', space=smem, size = 0x4, offset = 0x4, fixed_abs, tag = 'smem constant byte address 0x4 - core index']
  #allocation1 [shape = 'u32[144,128]{1,0:T(1,128)}', space=vmem, size = 0x12000, scoped, tag = 'internal scratch']
  %s0 = inlined_call_operand.vmem [shape: bf16[8,128], index: 0, kind: input, shape index: {}]
  %s1 = inlined_call_operand.vmem [shape: bf16[128,128], index: 1, kind: input, shape index: {}]
  %s2 = inlined_call_operand.vmem [shape: f32[1,128], index: 2, kind: input, shape index: {}]
  %s3 = inlined_call_operand.vmem [shape: bf16[128,128], index: 3, kind: input, shape index: {}]
  %s4 = inlined_call_operand.vmem [shape: f32[1,128], index: 4, kind: input, shape index: {}]
  %s5 = inlined_call_operand.vmem [shape: bf16[128,128], index: 5, kind: input, shape index: {}]
  %s6 = inlined_call_operand.vmem [shape: f32[1,128], index: 6, kind: input, shape index: {}]
  %s7 = inlined_call_operand.hbm [shape: f32[8,128], index: 7, kind: output, shape index: {}]
  %s8 = sld [smem:[#allocation0]]
  $region38: #{three_layer_nn.1} parent=0
    _
  %s10 = ssub.s32 1, %s8
  %s11 = scalar_select 0, %s10, %s8
  $region1: #{three_layer_nn.1} parent=0
    #allocation2 [shape = 'u8[4096]{0}', space=vmem, size = 0x1000, scoped, tag = 'output window, operand 0, single buffered']
    #allocation3 [shape = 's32[1]{0}', space=sflag, size = 0x4, scoped, tag = 'scoped memory for three_layer_nn.1']
    %12 = vsyncpa [#allocation3], 0
    // Predicated region
    $region2: #{three_layer_nn.1} parent=1 // pred_check
      _
    $region3: #{three_layer_nn.1} parent=1 // pred_check_branch
      %14 = sbr.rel (0) target = $region5
    $region4: #{three_layer_nn.1} parent=1 // pred_region
      _
    $region5: #{three_layer_nn.1} parent=1 // pred_fallthru
      _
    // Predicated region
    $region6: #{three_layer_nn.1} parent=1 // pred_check
      _
    $region7: #{three_layer_nn.1} parent=1 // pred_check_branch
      %16 = sbr.rel (0) target = $region9
    $region8: #{three_layer_nn.1} parent=1 // pred_region
      _
    $region9: #{three_layer_nn.1} parent=1 // pred_fallthru
      _
    // Predicated region
    $region10: #{three_layer_nn.1} parent=1 // pred_check
      _
    $region11: #{three_layer_nn.1} parent=1 // pred_check_branch
      %18 = sbr.rel (0) target = $region13
    $region12: #{three_layer_nn.1} parent=1 // pred_region
      _
    $region13: #{three_layer_nn.1} parent=1 // pred_fallthru
      _
    // Predicated region
    $region14: #{three_layer_nn.1} parent=1 // pred_check
      _
    $region15: #{three_layer_nn.1} parent=1 // pred_check_branch
      %20 = sbr.rel (0) target = $region17
    $region16: #{three_layer_nn.1} parent=1 // pred_region
      _
    $region17: #{three_layer_nn.1} parent=1 // pred_fallthru
      _
    // Predicated region
    $region18: #{three_layer_nn.1} parent=1 // pred_check
      _
    $region19: #{three_layer_nn.1} parent=1 // pred_check_branch
      %22 = sbr.rel (0) target = $region21
    $region20: #{three_layer_nn.1} parent=1 // pred_region
      _
    $region21: #{three_layer_nn.1} parent=1 // pred_fallthru
      _
    // Predicated region
    $region22: #{three_layer_nn.1} parent=1 // pred_check
      _
    $region23: #{three_layer_nn.1} parent=1 // pred_check_branch
      %24 = sbr.rel (0) target = $region25
    $region24: #{three_layer_nn.1} parent=1 // pred_region
      _
    $region25: #{three_layer_nn.1} parent=1 // pred_fallthru
      _
    // Predicated region
    $region26: #{three_layer_nn.1} parent=1 // pred_check
      _
    $region27: #{three_layer_nn.1} parent=1 // pred_check_branch
      %26 = sbr.rel (0) target = $region29
    $region28: #{three_layer_nn.1} parent=1 // pred_region
      _
    $region29: #{three_layer_nn.1} parent=1 // pred_fallthru
      _
    %v28 = vld [vmem:[%s0] sm:$0xf]
    %v29 = vld [vmem:[%s1] sm:$0xf]
    %v30 = vld [vmem:[%s1 + $0x4] sm:$0xf]
    %v31 = vld [vmem:[%s1 + $0x8] sm:$0xf]
    %v32 = vld [vmem:[%s1 + $0xc] sm:$0xf]
    %v33 = vld [vmem:[%s1 + $0x10] sm:$0xf]
    %v34 = vld [vmem:[%s1 + $0x14] sm:$0xf]
    %v35 = vld [vmem:[%s1 + $0x18] sm:$0xf]
    %v36 = vld [vmem:[%s1 + $0x1c] sm:$0xf]
    %v37 = vld [vmem:[%s1 + $0x20] sm:$0xf]
    %v38 = vld [vmem:[%s1 + $0x24] sm:$0xf]
    %v39 = vld [vmem:[%s1 + $0x28] sm:$0xf]
    %v40 = vld [vmem:[%s1 + $0x2c] sm:$0xf]
    %v41 = vld [vmem:[%s1 + $0x30] sm:$0xf]
    %v42 = vld [vmem:[%s1 + $0x34] sm:$0xf]
    %v43 = vld [vmem:[%s1 + $0x38] sm:$0xf]
    %v44 = vld [vmem:[%s1 + $0x3c] sm:$0xf]
    %v45 = vld [vmem:[%s2] sm:$0x1]
    %v47 = vlaneseq
    %v48 = vshrl.u32 %v47, 7
    %v49 = vsub.s32 0, %v48
    %v50 = vrot.slane %v45, %v49
    %v68 = vunpack.c.l.b16 %v29
    %v69 = vunpack.c.l.b16 %v30
    %v70 = vunpack.c.l.b16 %v31
    %v71 = vunpack.c.l.b16 %v32
    %v72 = vunpack.c.l.b16 %v33
    %v73 = vunpack.c.l.b16 %v34
    %v74 = vunpack.c.l.b16 %v35
    %v75 = vunpack.c.l.b16 %v36
    %v76 = vunpack.c.l.b16 %v37
    %v77 = vunpack.c.l.b16 %v38
    %v78 = vunpack.c.l.b16 %v39
    %v79 = vunpack.c.l.b16 %v40
    %v80 = vunpack.c.l.b16 %v41
    %v81 = vunpack.c.l.b16 %v42
    %v82 = vunpack.c.l.b16 %v43
    %v83 = vunpack.c.l.b16 %v44
    %v84 = vpack.c.b16 %v69, %v68
    %v85 = vpack.c.b16 %v71, %v70
    %v86 = vpack.c.b16 %v73, %v72
    %v87 = vpack.c.b16 %v75, %v74
    %v88 = vpack.c.b16 %v77, %v76
    %v89 = vpack.c.b16 %v79, %v78
    %v90 = vpack.c.b16 %v81, %v80
    %v91 = vpack.c.b16 %v83, %v82
    %100 = vmatprep.subr.bf16.mxu0 0
    %101 = vmatpush1.bf16.msra.mxu0 %v84
    %102 = vmatprep.subr.bf16.mxu0 0
    %103 = vmatpush1.bf16.msra.mxu0 %v85
    %104 = vmatprep.subr.bf16.mxu0 0
    %105 = vmatpush1.bf16.msra.mxu0 %v86
    %106 = vmatprep.subr.bf16.mxu0 0
    %107 = vmatpush1.bf16.msra.mxu0 %v87
    %108 = vmatprep.subr.bf16.mxu0 0
    %109 = vmatpush1.bf16.msra.mxu0 %v88
    %110 = vmatprep.subr.bf16.mxu0 0
    %111 = vmatpush1.bf16.msra.mxu0 %v89
    %112 = vmatprep.subr.bf16.mxu0 0
    %113 = vmatpush1.bf16.msra.mxu0 %v90
    %114 = vmatprep.subr.bf16.mxu0 0
    %115 = vmatpush1.bf16.msra.mxu0 %v91
    %116 = vmatprep.subr.bf16.mxu0 0
    %117 = vmatpush1.bf16.msra.mxu0 0
    %118 = vmatprep.subr.bf16.mxu0 0
    %119 = vmatpush1.bf16.msra.mxu0 0
    %120 = vmatprep.subr.bf16.mxu0 0
    %121 = vmatpush1.bf16.msra.mxu0 0
    %122 = vmatprep.subr.bf16.mxu0 0
    %123 = vmatpush1.bf16.msra.mxu0 0
    %124 = vmatprep.subr.bf16.mxu0 0
    %125 = vmatpush1.bf16.msra.mxu0 0
    %126 = vmatprep.subr.bf16.mxu0 0
    %127 = vmatpush1.bf16.msra.mxu0 0
    %128 = vmatprep.subr.bf16.mxu0 0
    %129 = vmatpush1.bf16.msra.mxu0 0
    %130 = vmatprep.subr.bf16.mxu0 0
    %131 = vmatpush1.bf16.msra.mxu0 0
    %132 = vmatprep.mubr.bf16.mxu0 0
    %133 = vmatmul.mubr.bf16.gmra.mrb[0].mxu0 %v28
    %v134 = vpop.f32.mrb[0].mxu0
    %v135 = vadd.f32 %v50, %v134
    %v136 = vpop.f32.mrb[0].mxu0
    %v137 = vpop.f32.mrb[0].mxu0
    %v138 = vpop.f32.mrb[0].mxu0
    %139 = vdwg.mxu0
    %v140 = vmax.f32 %v135, 0.0
    %v141 = vpack.c.bf16 %v140, %v140
    %v142 = vld [vmem:[%s3] sm:$0xf]
    %v143 = vld [vmem:[%s3 + $0x4] sm:$0xf]
    %v144 = vld [vmem:[%s3 + $0x8] sm:$0xf]
    %v145 = vld [vmem:[%s3 + $0xc] sm:$0xf]
    %v146 = vld [vmem:[%s3 + $0x10] sm:$0xf]
    %v147 = vld [vmem:[%s3 + $0x14] sm:$0xf]
    %v148 = vld [vmem:[%s3 + $0x18] sm:$0xf]
    %v149 = vld [vmem:[%s3 + $0x1c] sm:$0xf]
    %v150 = vld [vmem:[%s3 + $0x20] sm:$0xf]
    %v151 = vld [vmem:[%s3 + $0x24] sm:$0xf]
    %v152 = vld [vmem:[%s3 + $0x28] sm:$0xf]
    %v153 = vld [vmem:[%s3 + $0x2c] sm:$0xf]
    %v154 = vld [vmem:[%s3 + $0x30] sm:$0xf]
    %v155 = vld [vmem:[%s3 + $0x34] sm:$0xf]
    %v156 = vld [vmem:[%s3 + $0x38] sm:$0xf]
    %v157 = vld [vmem:[%s3 + $0x3c] sm:$0xf]
    %v158 = vld [vmem:[%s4] sm:$0x1]
    %v160 = vlaneseq
    %v161 = vshrl.u32 %v160, 7
    %v162 = vsub.s32 0, %v161
    %v163 = vrot.slane %v158, %v162
    %v181 = vunpack.c.l.b16 %v142
    %v182 = vunpack.c.l.b16 %v143
    %v183 = vunpack.c.l.b16 %v144
    %v184 = vunpack.c.l.b16 %v145
    %v185 = vunpack.c.l.b16 %v146
    %v186 = vunpack.c.l.b16 %v147
    %v187 = vunpack.c.l.b16 %v148
    %v188 = vunpack.c.l.b16 %v149
    %v189 = vunpack.c.l.b16 %v150
    %v190 = vunpack.c.l.b16 %v151
    %v191 = vunpack.c.l.b16 %v152
    %v192 = vunpack.c.l.b16 %v153
    %v193 = vunpack.c.l.b16 %v154
    %v194 = vunpack.c.l.b16 %v155
    %v195 = vunpack.c.l.b16 %v156
    %v196 = vunpack.c.l.b16 %v157
    %v197 = vpack.c.b16 %v182, %v181
    %v198 = vpack.c.b16 %v184, %v183
    %v199 = vpack.c.b16 %v186, %v185
    %v200 = vpack.c.b16 %v188, %v187
    %v201 = vpack.c.b16 %v190, %v189
    %v202 = vpack.c.b16 %v192, %v191
    %v203 = vpack.c.b16 %v194, %v193
    %v204 = vpack.c.b16 %v196, %v195
    %213 = vmatprep.subr.bf16.mxu0 0
    %214 = vmatpush1.bf16.msra.mxu0 %v197
    %215 = vmatprep.subr.bf16.mxu0 0
    %216 = vmatpush1.bf16.msra.mxu0 %v198
    %217 = vmatprep.subr.bf16.mxu0 0
    %218 = vmatpush1.bf16.msra.mxu0 %v199
    %219 = vmatprep.subr.bf16.mxu0 0
    %220 = vmatpush1.bf16.msra.mxu0 %v200
    %221 = vmatprep.subr.bf16.mxu0 0
    %222 = vmatpush1.bf16.msra.mxu0 %v201
    %223 = vmatprep.subr.bf16.mxu0 0
    %224 = vmatpush1.bf16.msra.mxu0 %v202
    %225 = vmatprep.subr.bf16.mxu0 0
    %226 = vmatpush1.bf16.msra.mxu0 %v203
    %227 = vmatprep.subr.bf16.mxu0 0
    %228 = vmatpush1.bf16.msra.mxu0 %v204
    %229 = vmatprep.subr.bf16.mxu0 0
    %230 = vmatpush1.bf16.msra.mxu0 0
    %231 = vmatprep.subr.bf16.mxu0 0
    %232 = vmatpush1.bf16.msra.mxu0 0
    %233 = vmatprep.subr.bf16.mxu0 0
    %234 = vmatpush1.bf16.msra.mxu0 0
    %235 = vmatprep.subr.bf16.mxu0 0
    %236 = vmatpush1.bf16.msra.mxu0 0
    %237 = vmatprep.subr.bf16.mxu0 0
    %238 = vmatpush1.bf16.msra.mxu0 0
    %239 = vmatprep.subr.bf16.mxu0 0
    %240 = vmatpush1.bf16.msra.mxu0 0
    %241 = vmatprep.subr.bf16.mxu0 0
    %242 = vmatpush1.bf16.msra.mxu0 0
    %243 = vmatprep.subr.bf16.mxu0 0
    %244 = vmatpush1.bf16.msra.mxu0 0
    %245 = vmatprep.mubr.bf16.mxu0 0
    %246 = vmatmul.mubr.bf16.gmra.mrb[0].mxu0 %v141
    %v247 = vpop.f32.mrb[0].mxu0
    %v248 = vadd.f32 %v163, %v247
    %v249 = vpop.f32.mrb[0].mxu0
    %v250 = vpop.f32.mrb[0].mxu0
    %v251 = vpop.f32.mrb[0].mxu0
    %252 = vdwg.mxu0
    %v253 = vmax.f32 %v248, 0.0
    %v254 = vpack.c.bf16 %v253, %v253
    %v255 = vld [vmem:[%s5] sm:$0xf]
    %v256 = vld [vmem:[%s5 + $0x4] sm:$0xf]
    %v257 = vld [vmem:[%s5 + $0x8] sm:$0xf]
    %v258 = vld [vmem:[%s5 + $0xc] sm:$0xf]
    %v259 = vld [vmem:[%s5 + $0x10] sm:$0xf]
    %v260 = vld [vmem:[%s5 + $0x14] sm:$0xf]
    %v261 = vld [vmem:[%s5 + $0x18] sm:$0xf]
    %v262 = vld [vmem:[%s5 + $0x1c] sm:$0xf]
    %v263 = vld [vmem:[%s5 + $0x20] sm:$0xf]
    %v264 = vld [vmem:[%s5 + $0x24] sm:$0xf]
    %v265 = vld [vmem:[%s5 + $0x28] sm:$0xf]
    %v266 = vld [vmem:[%s5 + $0x2c] sm:$0xf]
    %v267 = vld [vmem:[%s5 + $0x30] sm:$0xf]
    %v268 = vld [vmem:[%s5 + $0x34] sm:$0xf]
    %v269 = vld [vmem:[%s5 + $0x38] sm:$0xf]
    %v270 = vld [vmem:[%s5 + $0x3c] sm:$0xf]
    %v271 = vld [vmem:[%s6] sm:$0x1]
    %v273 = vlaneseq
    %v274 = vshrl.u32 %v273, 7
    %v275 = vsub.s32 0, %v274
    %v276 = vrot.slane %v271, %v275
    %v294 = vunpack.c.l.b16 %v255
    %v295 = vunpack.c.l.b16 %v256
    %v296 = vunpack.c.l.b16 %v257
    %v297 = vunpack.c.l.b16 %v258
    %v298 = vunpack.c.l.b16 %v259
    %v299 = vunpack.c.l.b16 %v260
    %v300 = vunpack.c.l.b16 %v261
    %v301 = vunpack.c.l.b16 %v262
    %v302 = vunpack.c.l.b16 %v263
    %v303 = vunpack.c.l.b16 %v264
    %v304 = vunpack.c.l.b16 %v265
    %v305 = vunpack.c.l.b16 %v266
    %v306 = vunpack.c.l.b16 %v267
    %v307 = vunpack.c.l.b16 %v268
    %v308 = vunpack.c.l.b16 %v269
    %v309 = vunpack.c.l.b16 %v270
    %v310 = vpack.c.b16 %v295, %v294
    %v311 = vpack.c.b16 %v297, %v296
    %v312 = vpack.c.b16 %v299, %v298
    %v313 = vpack.c.b16 %v301, %v300
    %v314 = vpack.c.b16 %v303, %v302
    %v315 = vpack.c.b16 %v305, %v304
    %v316 = vpack.c.b16 %v307, %v306
    %v317 = vpack.c.b16 %v309, %v308
    %326 = vmatprep.subr.bf16.mxu0 0
    %327 = vmatpush1.bf16.msra.mxu0 %v310
    %328 = vmatprep.subr.bf16.mxu0 0
    %329 = vmatpush1.bf16.msra.mxu0 %v311
    %330 = vmatprep.subr.bf16.mxu0 0
    %331 = vmatpush1.bf16.msra.mxu0 %v312
    %332 = vmatprep.subr.bf16.mxu0 0
    %333 = vmatpush1.bf16.msra.mxu0 %v313
    %334 = vmatprep.subr.bf16.mxu0 0
    %335 = vmatpush1.bf16.msra.mxu0 %v314
    %336 = vmatprep.subr.bf16.mxu0 0
    %337 = vmatpush1.bf16.msra.mxu0 %v315
    %338 = vmatprep.subr.bf16.mxu0 0
    %339 = vmatpush1.bf16.msra.mxu0 %v316
    %340 = vmatprep.subr.bf16.mxu0 0
    %341 = vmatpush1.bf16.msra.mxu0 %v317
    %342 = vmatprep.subr.bf16.mxu0 0
    %343 = vmatpush1.bf16.msra.mxu0 0
    %344 = vmatprep.subr.bf16.mxu0 0
    %345 = vmatpush1.bf16.msra.mxu0 0
    %346 = vmatprep.subr.bf16.mxu0 0
    %347 = vmatpush1.bf16.msra.mxu0 0
    %348 = vmatprep.subr.bf16.mxu0 0
    %349 = vmatpush1.bf16.msra.mxu0 0
    %350 = vmatprep.subr.bf16.mxu0 0
    %351 = vmatpush1.bf16.msra.mxu0 0
    %352 = vmatprep.subr.bf16.mxu0 0
    %353 = vmatpush1.bf16.msra.mxu0 0
    %354 = vmatprep.subr.bf16.mxu0 0
    %355 = vmatpush1.bf16.msra.mxu0 0
    %356 = vmatprep.subr.bf16.mxu0 0
    %357 = vmatpush1.bf16.msra.mxu0 0
    %358 = vmatprep.mubr.bf16.mxu0 0
    %359 = vmatmul.mubr.bf16.gmra.mrb[0].mxu0 %v254
    %v360 = vpop.f32.mrb[0].mxu0
    %v361 = vadd.f32 %v276, %v360
    %v362 = vpop.f32.mrb[0].mxu0
    %v363 = vpop.f32.mrb[0].mxu0
    %v364 = vpop.f32.mrb[0].mxu0
    %365 = vdwg.mxu0
    %366 = vmax.xlane.f32.xlu0 %v361
    %v367 = vpop.xlane.xlu0 %366
    %v368 = vsub.f32 %v361, %v367
    %v369 = vmul.f32 %v368, 1.442695
    %v370 = vpow.pop %v369
    %371 = vadd.xlane.f32.xlu0 %v370
    %v372 = vpop.xlane.xlu0 %371
    %v373 = vrcp.pop %v372
    %v374 = vmul.f32 %v370, %v373
    %375 = vst [vmem:[#allocation2] sm:$0xff] %v374
    // Predicated region
    $region30: #{three_layer_nn.1} parent=1 // pred_check
      _
    $region31: #{three_layer_nn.1} parent=1 // pred_check_branch
      %377 = sbr.rel (0) target = $region33
    $region32: #{three_layer_nn.1} parent=1 // pred_region
      %s379 = ssub.s32 128, 128
      %380 = vsyncadd [#allocation3], %s379
      %s382 = sshll.u32 [#allocation2], 4
      %s383 = int_to_ptr.vmem [resolvable:$true] %s382
      %385 = dma.vmem_to_hbm [thread:$0]  %s383, 128, %s7, [#allocation3]
    $region33: #{three_layer_nn.1} parent=1 // pred_fallthru
      _
    // Predicated region
    $region34: #{three_layer_nn.1} parent=1 // pred_check
      _
    $region35: #{three_layer_nn.1} parent=1 // pred_check_branch
      %387 = sbr.rel (0) target = $region37
    $region36: #{three_layer_nn.1} parent=1 // pred_region
      %388 = dma.done [#allocation3], 128
    $region37: #{three_layer_nn.1} parent=1 // pred_fallthru
      _
    %389 = vsyncpa [#allocation3], 1

</llo_original>
